<compile_context>
chip_gen: v6e
topology: v6e:2x2x1
jax: 0.10.0
libtpu: 0.0.40
codegen_flags: <defaults>
</compile_context>

<pallas_src>
import functools

import jax
import jax.numpy as jnp
from jax.experimental import pallas as pl
from jax.experimental.pallas import tpu as pltpu


def _sepconv_kernel(x_ref, wdw_ref, wpw_ref, b_ref, o_ref, *,
                    KH, KW, stride, TH, C_in, W_s1, neg_slope):
    # x_ref  : (1, Hp, Wp*C_in)          lane-dense padded input, one batch elem
    # wdw_ref: (KH*KW, W_s1*C_in)        depthwise weights, channel pattern tiled along lanes
    # wpw_ref: (W_s1*C_in, W_out*C_out)  block-diagonal pointwise weights (stride folded in)
    # b_ref  : (1, W_out*C_out)          fused bias, tiled along lanes
    # o_ref  : (1, TH, W_out*C_out)      lane-dense output row tile
    Kl = W_s1 * C_in
    h0 = pl.multiple_of(pl.program_id(1) * TH, TH)  # first output row of this tile

    # ---- depthwise conv: lane-dense VPU multiply-accumulate, one tap at a time ----
    dw = jnp.zeros((TH, Kl), jnp.float32)
    for kh in range(KH):
        for kw in range(KW):
            tap = kh * KW + kw
            row_start = h0 * stride + kh
            if stride == 1:
                rows = pl.ds(row_start, TH)
            else:
                rows = pl.ds(row_start, TH, stride)     # strided-row load on the ref
            win = x_ref[0, rows, pl.ds(kw * C_in, Kl)]  # (TH, W_s1*C_in), no whole-image load
            dw = dw + win * wdw_ref[tap:tap + 1, :]

    # ---- pointwise 1x1 conv (+ width-stride selection) as a single MXU matmul ----
    acc = jnp.dot(dw, wpw_ref[...], preferred_element_type=jnp.float32)
    acc = acc + b_ref[...]                              # lane-dense bias: one vadd
    # LeakyReLU (negative_slope = 0.01)
    o_ref[0] = jnp.where(acc >= 0, acc, neg_slope * acc).astype(o_ref.dtype)


def sepconv_pallas(x_nchw, w_dw, b_dw, w_pw, b_pw, *, stride, padding, neg_slope=0.01):
    """x: (N,C_in,H,W); w_dw: (C_in,1,KH,KW); b_dw: (C_in,);
    w_pw: (C_out,C_in,1,1); b_pw: (C_out,)."""
    N, C_in, H, W = x_nchw.shape
    C_out = w_pw.shape[0]
    KH, KW = w_dw.shape[2], w_dw.shape[3]
    H_out = (H + 2 * padding - KH) // stride + 1
    W_out = (W + 2 * padding - KW) // stride + 1
    Hp, Wp = H + 2 * padding, W + 2 * padding
    W_s1 = Wp - KW + 1  # stride-1 width positions produced by the depthwise stage
    dt = x_nchw.dtype

    # ---- layout glue (plain JAX, outside the kernel) ----
    x_nhwc = jnp.transpose(x_nchw, (0, 2, 3, 1))
    x_pad = jnp.pad(x_nhwc, ((0, 0), (padding, padding), (padding, padding), (0, 0)))
    x_flat = x_pad.reshape(N, Hp, Wp * C_in)                       # lane-dense input

    # Depthwise weights -> (KH*KW, W_s1*C_in): per-tap channel pattern tiled along lanes.
    wdw_taps = jnp.transpose(w_dw.reshape(C_in, KH, KW), (1, 2, 0)).reshape(KH * KW, C_in)
    wdw_tiled = jnp.tile(wdw_taps, (1, W_s1)).astype(dt)

    # Pointwise weights -> block-diagonal (W_s1*C_in, W_out*C_out). The block
    # structure maps dw lane (u*C_in + c) to out lane (w*C_out + co) only when
    # u == w*stride, so the matmul also performs the width-stride selection and
    # emits a fully lane-dense output. (For large W*C, width-tile this weight.)
    wpw = w_pw.reshape(C_out, C_in)
    sel = (jnp.arange(W_s1)[:, None] == (jnp.arange(W_out) * stride)[None, :]).astype(dt)
    wbig = (sel[:, None, :, None] * wpw.T[None, :, None, :]).reshape(
        W_s1 * C_in, W_out * C_out)

    # Fused bias: pointwise applied to the depthwise bias, plus pointwise bias.
    bias_eff = wpw @ b_dw + b_pw                                   # (C_out,)
    bias_tiled = jnp.tile(bias_eff, W_out).reshape(1, W_out * C_out).astype(dt)

    # Row tile: 8 output rows when possible (8x128-aligned output block), else full height.
    TH = 8 if H_out % 8 == 0 else H_out

    kernel = functools.partial(
        _sepconv_kernel, KH=KH, KW=KW, stride=stride, TH=TH,
        C_in=C_in, W_s1=W_s1, neg_slope=neg_slope)

    out_flat = pl.pallas_call(
        kernel,
        out_shape=jax.ShapeDtypeStruct((N, H_out, W_out * C_out), dt),
        grid_spec=pltpu.PrefetchScalarGridSpec(
            num_scalar_prefetch=0,
            grid=(N, H_out // TH),
            in_specs=[
                pl.BlockSpec((1, Hp, Wp * C_in), lambda n, rt: (n, 0, 0)),
                pl.BlockSpec((KH * KW, W_s1 * C_in), lambda n, rt: (0, 0)),
                pl.BlockSpec((W_s1 * C_in, W_out * C_out), lambda n, rt: (0, 0)),
                pl.BlockSpec((1, W_out * C_out), lambda n, rt: (0, 0)),
            ],
            out_specs=pl.BlockSpec((1, TH, W_out * C_out), lambda n, rt: (n, rt, 0)),
        ),
        compiler_params=pltpu.CompilerParams(
            dimension_semantics=("parallel", "parallel")),
    )(x_flat, wdw_tiled, wbig, bias_tiled)

    # Lane-dense slab -> NHWC -> NCHW (PyTorch convention).
    out_nhwc = out_flat.reshape(N, H_out, W_out, C_out)
    return jnp.transpose(out_nhwc, (0, 3, 1, 2))


def sepconv_reference(x, w_dw, b_dw, w_pw, b_pw, *, stride, padding, neg_slope=0.01):
    """Pure-JAX reference (two lax convs) for correctness checking."""
    C_in = x.shape[1]
    y = jax.lax.conv_general_dilated(
        x, w_dw, window_strides=(stride, stride),
        padding=((padding, padding), (padding, padding)),
        dimension_numbers=("NCHW", "OIHW", "NCHW"),
        feature_group_count=C_in)
    y = y + b_dw.reshape(1, -1, 1, 1)
    y = jax.lax.conv_general_dilated(
        y, w_pw, window_strides=(1, 1), padding=((0, 0), (0, 0)),
        dimension_numbers=("NCHW", "OIHW", "NCHW"))
    y = y + b_pw.reshape(1, -1, 1, 1)
    return jnp.where(y >= 0, y, neg_slope * y)


if __name__ == "__main__":
    # SepConv(C_in=4, C_out=8, kernel_size=3, stride=1, padding=1)
    N, C_in, H, W = 2, 4, 16, 16
    C_out, K, stride, padding = 8, 3, 1, 1

    key = jax.random.PRNGKey(0)
    kx, k1, k2, k3, k4 = jax.random.split(key, 5)
    x = jax.random.normal(kx, (N, C_in, H, W), dtype=jnp.float32)

    # Deterministic kaiming-uniform-like parameter init (PyTorch Conv2d default scale).
    fan_dw = 1 * K * K
    bd = 1.0 / (fan_dw ** 0.5)
    w_dw = jax.random.uniform(k1, (C_in, 1, K, K), jnp.float32, -bd, bd)
    b_dw = jax.random.uniform(k2, (C_in,), jnp.float32, -bd, bd)
    fan_pw = C_in
    bp = 1.0 / (fan_pw ** 0.5)
    w_pw = jax.random.uniform(k3, (C_out, C_in, 1, 1), jnp.float32, -bp, bp)
    b_pw = jax.random.uniform(k4, (C_out,), jnp.float32, -bp, bp)

    out = sepconv_pallas(x, w_dw, b_dw, w_pw, b_pw, stride=stride, padding=padding)
    out = jax.block_until_ready(out)

    ref = sepconv_reference(x, w_dw, b_dw, w_pw, b_pw, stride=stride, padding=padding)
    assert out.shape == (N, C_out, H, W), out.shape
    assert jnp.allclose(out, ref, atol=1e-5, rtol=1e-5)
    print("KERNEL_OK")
</pallas_src>

<mosaic_0001>
module attributes {stable_mosaic.version = 11 : i64} {
  func.func @_sepconv_kernel(%arg0: i32, %arg1: i32, %arg2: memref<1x18x72xf32, #tpu.memory_space<vmem>>, %arg3: memref<9x64xf32, #tpu.memory_space<vmem>>, %arg4: memref<64x128xf32, #tpu.memory_space<vmem>>, %arg5: memref<1x128xf32, #tpu.memory_space<vmem>>, %arg6: memref<1x8x128xf32, #tpu.memory_space<vmem>>) attributes {dimension_semantics = [#tpu.dimension_semantics<parallel>, #tpu.dimension_semantics<parallel>], iteration_bounds = array<i64: 2, 2>, scalar_prefetch = 0 : i64, scratch_operands = 0 : i64, tpu.core_type = #tpu.core_type<tc>, window_params = [{transform_indices = @transform_0, window_bounds = array<i64: 1, 18, 72>}, {pipeline_mode = #tpu.pipeline_mode<synchronous>, transform_indices = @transform_1, window_bounds = array<i64: 9, 64>}, {pipeline_mode = #tpu.pipeline_mode<synchronous>, transform_indices = @transform_2, window_bounds = array<i64: 64, 128>}, {pipeline_mode = #tpu.pipeline_mode<synchronous>, transform_indices = @transform_3, window_bounds = array<i64: 1, 128>}, {transform_indices = @transform_4, window_bounds = array<i64: 1, 8, 128>}]} {
    %c8_i32 = arith.constant 8 : i32
    %0 = arith.muli %arg1, %c8_i32 : i32
    %1 = tpu.assume_multiple %0, 8 : i32
    %cst = arith.constant 0.000000e+00 : f32
    %2 = vector.broadcast %cst : f32 to vector<8x64xf32>
    %c1_i32 = arith.constant 1 : i32
    %3 = arith.muli %1, %c1_i32 : i32
    %c0_i32 = arith.constant 0 : i32
    %4 = arith.addi %3, %c0_i32 : i32
    %c0 = arith.constant 0 : index
    %5 = arith.index_cast %4 : i32 to index
    %c0_0 = arith.constant 0 : index
    %6 = vector.load %arg2[%c0, %5, %c0_0] : memref<1x18x72xf32, #tpu.memory_space<vmem>>, vector<1x8x64xf32>
    %7 = vector.shape_cast %6 : vector<1x8x64xf32> to vector<8x64xf32>
    %c0_1 = arith.constant 0 : index
    %c0_2 = arith.constant 0 : index
    %8 = vector.load %arg3[%c0_1, %c0_2] : memref<9x64xf32, #tpu.memory_space<vmem>>, vector<1x64xf32>
    %9 = vector.broadcast %8 : vector<1x64xf32> to vector<8x64xf32>
    %10 = arith.mulf %7, %9 : vector<8x64xf32>
    %11 = arith.addf %2, %10 : vector<8x64xf32>
    %c1_i32_3 = arith.constant 1 : i32
    %12 = arith.muli %1, %c1_i32_3 : i32
    %c0_i32_4 = arith.constant 0 : i32
    %13 = arith.addi %12, %c0_i32_4 : i32
    %c0_5 = arith.constant 0 : index
    %14 = arith.index_cast %13 : i32 to index
    %c4 = arith.constant 4 : index
    %15 = vector.load %arg2[%c0_5, %14, %c4] : memref<1x18x72xf32, #tpu.memory_space<vmem>>, vector<1x8x64xf32>
    %16 = vector.shape_cast %15 : vector<1x8x64xf32> to vector<8x64xf32>
    %c1 = arith.constant 1 : index
    %c0_6 = arith.constant 0 : index
    %17 = vector.load %arg3[%c1, %c0_6] : memref<9x64xf32, #tpu.memory_space<vmem>>, vector<1x64xf32>
    %18 = vector.broadcast %17 : vector<1x64xf32> to vector<8x64xf32>
    %19 = arith.mulf %16, %18 : vector<8x64xf32>
    %20 = arith.addf %11, %19 : vector<8x64xf32>
    %c1_i32_7 = arith.constant 1 : i32
    %21 = arith.muli %1, %c1_i32_7 : i32
    %c0_i32_8 = arith.constant 0 : i32
    %22 = arith.addi %21, %c0_i32_8 : i32
    %c0_9 = arith.constant 0 : index
    %23 = arith.index_cast %22 : i32 to index
    %c8 = arith.constant 8 : index
    %24 = vector.load %arg2[%c0_9, %23, %c8] : memref<1x18x72xf32, #tpu.memory_space<vmem>>, vector<1x8x64xf32>
    %25 = vector.shape_cast %24 : vector<1x8x64xf32> to vector<8x64xf32>
    %c2 = arith.constant 2 : index
    %c0_10 = arith.constant 0 : index
    %26 = vector.load %arg3[%c2, %c0_10] : memref<9x64xf32, #tpu.memory_space<vmem>>, vector<1x64xf32>
    %27 = vector.broadcast %26 : vector<1x64xf32> to vector<8x64xf32>
    %28 = arith.mulf %25, %27 : vector<8x64xf32>
    %29 = arith.addf %20, %28 : vector<8x64xf32>
    %c1_i32_11 = arith.constant 1 : i32
    %30 = arith.muli %1, %c1_i32_11 : i32
    %c1_i32_12 = arith.constant 1 : i32
    %31 = arith.addi %30, %c1_i32_12 : i32
    %c0_13 = arith.constant 0 : index
    %32 = arith.index_cast %31 : i32 to index
    %c0_14 = arith.constant 0 : index
    %33 = vector.load %arg2[%c0_13, %32, %c0_14] : memref<1x18x72xf32, #tpu.memory_space<vmem>>, vector<1x8x64xf32>
    %34 = vector.shape_cast %33 : vector<1x8x64xf32> to vector<8x64xf32>
    %c3 = arith.constant 3 : index
    %c0_15 = arith.constant 0 : index
    %35 = vector.load %arg3[%c3, %c0_15] : memref<9x64xf32, #tpu.memory_space<vmem>>, vector<1x64xf32>
    %36 = vector.broadcast %35 : vector<1x64xf32> to vector<8x64xf32>
    %37 = arith.mulf %34, %36 : vector<8x64xf32>
    %38 = arith.addf %29, %37 : vector<8x64xf32>
    %c1_i32_16 = arith.constant 1 : i32
    %39 = arith.muli %1, %c1_i32_16 : i32
    %c1_i32_17 = arith.constant 1 : i32
    %40 = arith.addi %39, %c1_i32_17 : i32
    %c0_18 = arith.constant 0 : index
    %41 = arith.index_cast %40 : i32 to index
    %c4_19 = arith.constant 4 : index
    %42 = vector.load %arg2[%c0_18, %41, %c4_19] : memref<1x18x72xf32, #tpu.memory_space<vmem>>, vector<1x8x64xf32>
    %43 = vector.shape_cast %42 : vector<1x8x64xf32> to vector<8x64xf32>
    %c4_20 = arith.constant 4 : index
    %c0_21 = arith.constant 0 : index
    %44 = vector.load %arg3[%c4_20, %c0_21] : memref<9x64xf32, #tpu.memory_space<vmem>>, vector<1x64xf32>
    %45 = vector.broadcast %44 : vector<1x64xf32> to vector<8x64xf32>
    %46 = arith.mulf %43, %45 : vector<8x64xf32>
    %47 = arith.addf %38, %46 : vector<8x64xf32>
    %c1_i32_22 = arith.constant 1 : i32
    %48 = arith.muli %1, %c1_i32_22 : i32
    %c1_i32_23 = arith.constant 1 : i32
    %49 = arith.addi %48, %c1_i32_23 : i32
    %c0_24 = arith.constant 0 : index
    %50 = arith.index_cast %49 : i32 to index
    %c8_25 = arith.constant 8 : index
    %51 = vector.load %arg2[%c0_24, %50, %c8_25] : memref<1x18x72xf32, #tpu.memory_space<vmem>>, vector<1x8x64xf32>
    %52 = vector.shape_cast %51 : vector<1x8x64xf32> to vector<8x64xf32>
    %c5 = arith.constant 5 : index
    %c0_26 = arith.constant 0 : index
    %53 = vector.load %arg3[%c5, %c0_26] : memref<9x64xf32, #tpu.memory_space<vmem>>, vector<1x64xf32>
    %54 = vector.broadcast %53 : vector<1x64xf32> to vector<8x64xf32>
    %55 = arith.mulf %52, %54 : vector<8x64xf32>
    %56 = arith.addf %47, %55 : vector<8x64xf32>
    %c1_i32_27 = arith.constant 1 : i32
    %57 = arith.muli %1, %c1_i32_27 : i32
    %c2_i32 = arith.constant 2 : i32
    %58 = arith.addi %57, %c2_i32 : i32
    %c0_28 = arith.constant 0 : index
    %59 = arith.index_cast %58 : i32 to index
    %c0_29 = arith.constant 0 : index
    %60 = vector.load %arg2[%c0_28, %59, %c0_29] : memref<1x18x72xf32, #tpu.memory_space<vmem>>, vector<1x8x64xf32>
    %61 = vector.shape_cast %60 : vector<1x8x64xf32> to vector<8x64xf32>
    %c6 = arith.constant 6 : index
    %c0_30 = arith.constant 0 : index
    %62 = vector.load %arg3[%c6, %c0_30] : memref<9x64xf32, #tpu.memory_space<vmem>>, vector<1x64xf32>
    %63 = vector.broadcast %62 : vector<1x64xf32> to vector<8x64xf32>
    %64 = arith.mulf %61, %63 : vector<8x64xf32>
    %65 = arith.addf %56, %64 : vector<8x64xf32>
    %c1_i32_31 = arith.constant 1 : i32
    %66 = arith.muli %1, %c1_i32_31 : i32
    %c2_i32_32 = arith.constant 2 : i32
    %67 = arith.addi %66, %c2_i32_32 : i32
    %c0_33 = arith.constant 0 : index
    %68 = arith.index_cast %67 : i32 to index
    %c4_34 = arith.constant 4 : index
    %69 = vector.load %arg2[%c0_33, %68, %c4_34] : memref<1x18x72xf32, #tpu.memory_space<vmem>>, vector<1x8x64xf32>
    %70 = vector.shape_cast %69 : vector<1x8x64xf32> to vector<8x64xf32>
    %c7 = arith.constant 7 : index
    %c0_35 = arith.constant 0 : index
    %71 = vector.load %arg3[%c7, %c0_35] : memref<9x64xf32, #tpu.memory_space<vmem>>, vector<1x64xf32>
    %72 = vector.broadcast %71 : vector<1x64xf32> to vector<8x64xf32>
    %73 = arith.mulf %70, %72 : vector<8x64xf32>
    %74 = arith.addf %65, %73 : vector<8x64xf32>
    %c1_i32_36 = arith.constant 1 : i32
    %75 = arith.muli %1, %c1_i32_36 : i32
    %c2_i32_37 = arith.constant 2 : i32
    %76 = arith.addi %75, %c2_i32_37 : i32
    %c0_38 = arith.constant 0 : index
    %77 = arith.index_cast %76 : i32 to index
    %c8_39 = arith.constant 8 : index
    %78 = vector.load %arg2[%c0_38, %77, %c8_39] : memref<1x18x72xf32, #tpu.memory_space<vmem>>, vector<1x8x64xf32>
    %79 = vector.shape_cast %78 : vector<1x8x64xf32> to vector<8x64xf32>
    %c8_40 = arith.constant 8 : index
    %c0_41 = arith.constant 0 : index
    %80 = vector.load %arg3[%c8_40, %c0_41] : memref<9x64xf32, #tpu.memory_space<vmem>>, vector<1x64xf32>
    %81 = vector.broadcast %80 : vector<1x64xf32> to vector<8x64xf32>
    %82 = arith.mulf %79, %81 : vector<8x64xf32>
    %83 = arith.addf %74, %82 : vector<8x64xf32>
    %c0_42 = arith.constant 0 : index
    %c0_43 = arith.constant 0 : index
    %84 = vector.load %arg4[%c0_42, %c0_43] : memref<64x128xf32, #tpu.memory_space<vmem>>, vector<64x128xf32>
    %cst_44 = arith.constant dense<0.000000e+00> : vector<8x128xf32>
    %85 = tpu.matmul %83, %84, %cst_44 {dimension_numbers = #tpu.dot_dimension_numbers<[1], [0], [0], [1], [0, 0, 1, 1], [], []>} : vector<8x64xf32>, vector<64x128xf32>, vector<8x128xf32> -> vector<8x128xf32>
    %c0_45 = arith.constant 0 : index
    %c0_46 = arith.constant 0 : index
    %86 = vector.load %arg5[%c0_45, %c0_46] : memref<1x128xf32, #tpu.memory_space<vmem>>, vector<1x128xf32>
    %87 = vector.broadcast %86 : vector<1x128xf32> to vector<8x128xf32>
    %88 = arith.addf %85, %87 : vector<8x128xf32>
    %cst_47 = arith.constant 0.000000e+00 : f32
    %89 = vector.broadcast %cst_47 : f32 to vector<8x128xf32>
    %90 = arith.cmpf oge, %88, %89 : vector<8x128xf32>
    %cst_48 = arith.constant 0.00999999977 : f32
    %91 = vector.broadcast %cst_48 : f32 to vector<8x128xf32>
    %92 = arith.mulf %91, %88 : vector<8x128xf32>
    %93 = arith.select %90, %88, %92 : vector<8x128xi1>, vector<8x128xf32>
    %c0_49 = arith.constant 0 : index
    %c0_50 = arith.constant 0 : index
    %c0_51 = arith.constant 0 : index
    %94 = vector.load %arg6[%c0_49, %c0_50, %c0_51] : memref<1x8x128xf32, #tpu.memory_space<vmem>>, vector<1x8x128xf32>
    %95 = vector.shape_cast %94 : vector<1x8x128xf32> to vector<8x128xf32>
    %96 = vector.shape_cast %93 : vector<8x128xf32> to vector<1x8x128xf32>
    tpu.vector_store %arg6[%c0_49, %c0_50, %c0_51], %96 {strides = array<i32>} : memref<1x8x128xf32, #tpu.memory_space<vmem>>, vector<1x8x128xf32>,
    return
  }
  func.func @transform_0(%arg0: i32, %arg1: i32) -> (i32, i32, i32) {
    %c0_i32 = arith.constant 0 : i32
    %c0_i32_0 = arith.constant 0 : i32
    %c0_i32_1 = arith.constant 0 : i32
    return %arg0, %c0_i32, %c0_i32_0 : i32, i32, i32
  }
  func.func @transform_1(%arg0: i32, %arg1: i32) -> (i32, i32) {
    %c0_i32 = arith.constant 0 : i32
    %c0_i32_0 = arith.constant 0 : i32
    %c0_i32_1 = arith.constant 0 : i32
    return %c0_i32, %c0_i32_0 : i32, i32
  }
  func.func @transform_2(%arg0: i32, %arg1: i32) -> (i32, i32) {
    %c0_i32 = arith.constant 0 : i32
    %c0_i32_0 = arith.constant 0 : i32
    %c0_i32_1 = arith.constant 0 : i32
    return %c0_i32, %c0_i32_0 : i32, i32
  }
  func.func @transform_3(%arg0: i32, %arg1: i32) -> (i32, i32) {
    %c0_i32 = arith.constant 0 : i32
    %c0_i32_0 = arith.constant 0 : i32
    %c0_i32_1 = arith.constant 0 : i32
    return %c0_i32, %c0_i32_0 : i32, i32
  }
  func.func @transform_4(%arg0: i32, %arg1: i32) -> (i32, i32, i32) {
    %c0_i32 = arith.constant 0 : i32
    %c0_i32_0 = arith.constant 0 : i32
    return %arg0, %arg1, %c0_i32 : i32, i32, i32
  }
}

</mosaic_0001>

<llo_original>
// kernel: tpu_custom_call.1
$region0: #{tpu_custom_call.1}
  #allocation0 [shape = 'u32[]', space=smem, size = 0x4, offset = 0x4, fixed_abs, tag = 'smem constant byte address 0x4 - core index']
  #allocation1 [shape = 'u32[144,128]{1,0:T(1,128)}', space=vmem, size = 0x12000, scoped, tag = 'internal scratch']
  %s0 = inlined_call_operand.vmem [shape: f32[2,18,72], index: 0, kind: input, shape index: {}]
  %s1 = inlined_call_operand.vmem [shape: f32[9,64], index: 1, kind: input, shape index: {}]
  %s2 = inlined_call_operand.vmem [shape: f32[64,128], index: 2, kind: input, shape index: {}]
  %s3 = inlined_call_operand.vmem [shape: f32[1,128], index: 3, kind: input, shape index: {}]
  %s4 = inlined_call_operand.hbm [shape: f32[2,16,128], index: 4, kind: output, shape index: {}]
  %s5 = sld [smem:[#allocation0]]
  $region49: #{tpu_custom_call.1} parent=0
    _
  %s7 = ssub.s32 1, %s5
  %s8 = scalar_select 0, %s7, %s5
  $region1: #{tpu_custom_call.1} parent=0
    #allocation2 [shape = 'u8[8192]{0}', space=vmem, size = 0x2000, scoped, tag = 'output window, operand 0']
    #allocation3 [shape = 's32[2]{0}', space=sflag, size = 0x8, scoped, tag = 'scoped memory for tpu_custom_call.1']
    %9 = vsyncpa [#allocation3], 0
    %s10 = scalar_lea.sflag [#allocation3], 1
    %11 = vsyncpa %s10, 0
    loop: start=0, step=1, limit=6
    $region2: #{tpu_custom_call.1} parent=1 // loop_pre_header
      _
    $region3: #{tpu_custom_call.1} parent=1 // loop_header
      %s13 = sphi 0, %s17
      %p14 = scmp.ge.s32.totalorder %s13, 6
      %s20 = sphi 0, %s32
      %s21 = sphi 0, %s28
      %s22 = sphi 0, %s20
      %s23 = sphi 0, %s21
      %s24 = sphi 0, %s22
      %s25 = sphi 0, %s23
      %s35 = sphi 0, %s37
      %s38 = sphi 0, %s35
      %s39 = sphi 0, %s38
      %s55 = sphi 0, %s39
      %s59 = sphi 0, %s59
      %s61 = sphi 0, %s59
      %s62 = sphi 0, %s61
      %s76 = sphi 0, %s62
      %s80 = sphi 0, %s80
      %s82 = sphi 0, %s80
      %s83 = sphi 0, %s82
      %s97 = sphi 0, %s83
      %s101 = sphi 0, %s101
      %s103 = sphi 0, %s101
      %s104 = sphi 0, %s103
      %s118 = sphi 0, %s104
      %s126 = sphi 0, %s128
      %s129 = sphi 0, %s126
      %s130 = sphi 0, %s129
      %s146 = sphi 0, %s130
    $region4: #{tpu_custom_call.1} parent=1 // loop_header_branch
      %16 = sbr.rel (%p14) target = $region8
    $region5: #{tpu_custom_call.1} parent=1 // loop_body
      %s18 = ssub.s32 %s13, 1
      %s19 = ssub.s32 %s13, 2
      %s26 = sadd.s32 1, %s21
      %p27 = scmp.ge.s32.totalorder %s26, 2
      %s28 = scalar_select %p27, 0, %s26
      %s29 = sadd.s32 1, %s20
      %s30 = scalar_select %p27, %s29, %s20
      %p31 = scmp.ge.s32.totalorder %s30, 2
      %s32 = scalar_select %p31, 0, %s30
      %s33 = ssub.s32 %s20, %s32
      %p34 = scmp.eq.s32.totalorder %s33, 0
      %s36 = sadd.s32 %s35, 1
      %s37 = scalar_select %p34, %s35, %s36
      %p40 = pneg %p34
      %p41 = scmp.eq.s32.totalorder %s13, 3
      %p42 = por %p40, %p41
      %p43 = scmp.ne.s32.totalorder %s35, %s38
      %p44 = scmp.eq.s32.totalorder %s13, 0
      %p45 = por %p43, %p44
      %p46 = scmp.ne.s32.totalorder %s35, %s38
      %p47 = scmp.eq.s32.totalorder %s18, 3
      %p48 = por %p46, %p47
      %p49 = scmp.ne.s32.totalorder %s38, %s39
      %p50 = scmp.eq.s32.totalorder %s18, 0
      %p51 = por %p49, %p50
      %p52 = scmp.ne.s32.totalorder %s38, %s39
      %p53 = scmp.eq.s32.totalorder %s19, 3
      %p54 = por %p52, %p53
      %p56 = scmp.ne.s32.totalorder %s39, %s55
      %p57 = scmp.eq.s32.totalorder %s19, 0
      %p58 = por %p56, %p57
      %s60 = sadd.s32 %s59, 1
      %p63 = scmp.eq.s32.totalorder %s13, 3
      %p64 = scmp.ne.s32.totalorder %s59, %s61
      %p65 = scmp.eq.s32.totalorder %s13, 0
      %p66 = por %p64, %p65
      %p67 = scmp.ne.s32.totalorder %s59, %s61
      %p68 = scmp.eq.s32.totalorder %s18, 3
      %p69 = por %p67, %p68
      %p70 = scmp.ne.s32.totalorder %s61, %s62
      %p71 = scmp.eq.s32.totalorder %s18, 0
      %p72 = por %p70, %p71
      %p73 = scmp.ne.s32.totalorder %s61, %s62
      %p74 = scmp.eq.s32.totalorder %s19, 3
      %p75 = por %p73, %p74
      %p77 = scmp.ne.s32.totalorder %s62, %s76
      %p78 = scmp.eq.s32.totalorder %s19, 0
      %p79 = por %p77, %p78
      %s81 = sadd.s32 %s80, 1
      %p84 = scmp.eq.s32.totalorder %s13, 3
      %p85 = scmp.ne.s32.totalorder %s80, %s82
      %p86 = scmp.eq.s32.totalorder %s13, 0
      %p87 = por %p85, %p86
      %p88 = scmp.ne.s32.totalorder %s80, %s82
      %p89 = scmp.eq.s32.totalorder %s18, 3
      %p90 = por %p88, %p89
      %p91 = scmp.ne.s32.totalorder %s82, %s83
      %p92 = scmp.eq.s32.totalorder %s18, 0
      %p93 = por %p91, %p92
      %p94 = scmp.ne.s32.totalorder %s82, %s83
      %p95 = scmp.eq.s32.totalorder %s19, 3
      %p96 = por %p94, %p95
      %p98 = scmp.ne.s32.totalorder %s83, %s97
      %p99 = scmp.eq.s32.totalorder %s19, 0
      %p100 = por %p98, %p99
      %s102 = sadd.s32 %s101, 1
      %p105 = scmp.eq.s32.totalorder %s13, 3
      %p106 = scmp.ne.s32.totalorder %s101, %s103
      %p107 = scmp.eq.s32.totalorder %s13, 0
      %p108 = por %p106, %p107
      %p109 = scmp.ne.s32.totalorder %s101, %s103
      %p110 = scmp.eq.s32.totalorder %s18, 3
      %p111 = por %p109, %p110
      %p112 = scmp.ne.s32.totalorder %s103, %s104
      %p113 = scmp.eq.s32.totalorder %s18, 0
      %p114 = por %p112, %p113
      %p115 = scmp.ne.s32.totalorder %s103, %s104
      %p116 = scmp.eq.s32.totalorder %s19, 3
      %p117 = por %p115, %p116
      %p119 = scmp.ne.s32.totalorder %s104, %s118
      %p120 = scmp.eq.s32.totalorder %s19, 0
      %p121 = por %p119, %p120
      %s122 = ssub.s32 %s20, %s32
      %s123 = ssub.s32 %s21, %s28
      %s124 = sor.u32 %s122, %s123
      %p125 = scmp.eq.s32.totalorder %s124, 0
      %s127 = sadd.s32 %s126, 1
      %s128 = scalar_select %p125, %s126, %s127
      %p131 = pneg %p125
      %p132 = scmp.eq.s32.totalorder %s13, 3
      %p133 = por %p131, %p132
      %p134 = scmp.ne.s32.totalorder %s126, %s129
      %p135 = scmp.eq.s32.totalorder %s13, 0
      %p136 = por %p134, %p135
      %p137 = scmp.ne.s32.totalorder %s126, %s129
      %p138 = scmp.eq.s32.totalorder %s18, 3
      %p139 = por %p137, %p138
      %p140 = scmp.ne.s32.totalorder %s129, %s130
      %p141 = scmp.eq.s32.totalorder %s18, 0
      %p142 = por %p140, %p141
      %p143 = scmp.ne.s32.totalorder %s129, %s130
      %p144 = scmp.eq.s32.totalorder %s19, 3
      %p145 = por %p143, %p144
      %p147 = scmp.ne.s32.totalorder %s130, %s146
      %p148 = scmp.eq.s32.totalorder %s19, 0
      %p149 = por %p147, %p148
      %p150 = scmp.le.s32.totalorder 1, %s13
      %p151 = scmp.lt.s32.totalorder %s13, 5
      %p152 = pnand %p150, %p151
      %p153 = pneg %p152
      // Predicated region
      $region9: #{tpu_custom_call.1} parent=5 // pred_check
        _
      $region10: #{tpu_custom_call.1} parent=5 // pred_check_branch
        %155 = sbr.rel (%p152) target = $region12
      $region11: #{tpu_custom_call.1} parent=5 // pred_region
        %s156 = ssub.s32 %s13, 1
        // Predicated region
        $region13: #{tpu_custom_call.1} parent=11 // pred_check
          %p157 = pneg %p72
        $region14: #{tpu_custom_call.1} parent=11 // pred_check_branch
          %159 = sbr.rel (%p157) target = $region16
        $region15: #{tpu_custom_call.1} parent=11 // pred_region
          _
        $region16: #{tpu_custom_call.1} parent=11 // pred_fallthru
          _
        // Predicated region
        $region17: #{tpu_custom_call.1} parent=11 // pred_check
          %p160 = pneg %p93
        $region18: #{tpu_custom_call.1} parent=11 // pred_check_branch
          %162 = sbr.rel (%p160) target = $region20
        $region19: #{tpu_custom_call.1} parent=11 // pred_region
          _
        $region20: #{tpu_custom_call.1} parent=11 // pred_fallthru
          _
        // Predicated region
        $region21: #{tpu_custom_call.1} parent=11 // pred_check
          %p163 = pneg %p114
        $region22: #{tpu_custom_call.1} parent=11 // pred_check_branch
          %165 = sbr.rel (%p163) target = $region24
        $region23: #{tpu_custom_call.1} parent=11 // pred_region
          _
        $region24: #{tpu_custom_call.1} parent=11 // pred_fallthru
          _
      $region12: #{tpu_custom_call.1} parent=5 // pred_fallthru
        _
      %p166 = scmp.lt.s32.totalorder %s13, 4
      // Predicated region
      $region25: #{tpu_custom_call.1} parent=5 // pred_check
        %p167 = pneg %p166
      $region26: #{tpu_custom_call.1} parent=5 // pred_check_branch
        %169 = sbr.rel (%p167) target = $region28
      $region27: #{tpu_custom_call.1} parent=5 // pred_region
        // Predicated region
        $region29: #{tpu_custom_call.1} parent=27 // pred_check
          %p170 = pneg %p45
        $region30: #{tpu_custom_call.1} parent=27 // pred_check_branch
          %172 = sbr.rel (%p170) target = $region32
        $region31: #{tpu_custom_call.1} parent=27 // pred_region
          %p173 = scmp.lt.s32.totalorder %s20, 1
          %s174 = scalar_select %p173, %s20, 1
          %s175 = smul.addr %s174, 3
          %s176 = smul.addr %s175, 8
          %s177 = scalar_lea.vmem %s0, %s176
        $region32: #{tpu_custom_call.1} parent=27 // pred_fallthru
          _
      $region28: #{tpu_custom_call.1} parent=5 // pred_fallthru
        _
      %p178 = scmp.le.s32.totalorder 1, %s13
      %p179 = scmp.lt.s32.totalorder %s13, 5
      %p180 = pnand %p178, %p179
      %p181 = pneg %p180
      // Predicated region
      $region33: #{tpu_custom_call.1} parent=5 // pred_check
        _
      $region34: #{tpu_custom_call.1} parent=5 // pred_check_branch
        %183 = sbr.rel (%p180) target = $region36
      $region35: #{tpu_custom_call.1} parent=5 // pred_region
        %s184 = ssub.s32 %s13, 1
        %p185 = scmp.lt.s32.totalorder %s22, 1
        %s186 = scalar_select %p185, %s22, 1
        %s187 = smul.addr %s186, 3
        %s188 = smul.addr %s187, 8
        %s189 = scalar_lea.vmem %s0, %s188
        %p190 = pneg %p51
        %p191 = pneg %p48
        %p192 = pneg %p72
        %p193 = pneg %p69
        %p194 = pneg %p93
        %p195 = pneg %p90
        %p196 = pneg %p114
        %p197 = pneg %p111
        %p198 = pneg %p142
        %p199 = pneg %p139
        %s200 = sand.u32 %s129, 1
        %s201 = scalar_lea.sflag [#allocation3], %s200
        %s202 = sand.u32 %s129, 1
        %s203 = smul.addr %s202, 8
        %s204 = scalar_lea.vmem [#allocation2], %s203
        %p205 = scmp.lt.s32.totalorder %s22, 1
        %s206 = scalar_select %p205, %s22, 1
        %s207 = smul.addr %s206, 3
        %s208 = smul.addr %s207, 8
        %s209 = scalar_lea.vmem %s0, %s208
        %s210 = smul.u32 %s23, 8
        %s211 = scalar_lea.vmem %s209, %s210
        %v212 = vld [vmem:[%s211] sm:$0xff]
        %v213 = vld [vmem:[%s1] sm:$0x1]
        %v214 = vlaneseq
        %v215 = vshrl.u32 %v214, 7
        %v216 = vsub.s32 0, %v215
        %v217 = vrot.slane %v213, %v216
        %v218 = vmul.f32 %v212, %v217
        %v219 = vadd.f32 %v218, 0.0
        %v220 = vld [vmem:[%s1 + $0x1] sm:$0x1]
        %v221 = vlaneseq
        %v222 = vshrl.u32 %v221, 7
        %v223 = vsub.s32 0, %v222
        %v224 = vrot.slane %v220, %v223
        %226 = vrot.lane.b32.xlu0 %v224, 4
        %v227 = vpop.permute.xlu0 %226
        %v229 = vmul.f32 %v212, %v227
        %231 = vrot.lane.b32.xlu0 %v229, 124
        %v232 = vpop.permute.xlu0 %231
        %v234 = vadd.f32 %v219, %v232
        %v235 = vld [vmem:[%s1 + $0x2] sm:$0x1]
        %v236 = vlaneseq
        %v237 = vshrl.u32 %v236, 7
        %v238 = vsub.s32 0, %v237
        %v239 = vrot.slane %v235, %v238
        %241 = vrot.lane.b32.xlu0 %v239, 8
        %v242 = vpop.permute.xlu0 %241
        %v244 = vmul.f32 %v212, %v242
        %246 = vrot.lane.b32.xlu0 %v244, 120
        %v247 = vpop.permute.xlu0 %246
        %v249 = vadd.f32 %v234, %v247
        %s250 = sadd.s32 %s210, 1
        %s251 = scalar_lea.vmem %s209, %s250
        %v252 = vld [vmem:[%s251] sm:$0xff]
        %v253 = vld [vmem:[%s1 + $0x3] sm:$0x1]
        %v254 = vlaneseq
        %v255 = vshrl.u32 %v254, 7
        %v256 = vsub.s32 0, %v255
        %v257 = vrot.slane %v253, %v256
        %v258 = vmul.f32 %v252, %v257
        %v259 = vadd.f32 %v249, %v258
        %v260 = vld [vmem:[%s1 + $0x4] sm:$0x1]
        %v261 = vlaneseq
        %v262 = vshrl.u32 %v261, 7
        %v263 = vsub.s32 0, %v262
        %v264 = vrot.slane %v260, %v263
        %266 = vrot.lane.b32.xlu0 %v264, 4
        %v267 = vpop.permute.xlu0 %266
        %v269 = vmul.f32 %v252, %v267
        %271 = vrot.lane.b32.xlu0 %v269, 124
        %v272 = vpop.permute.xlu0 %271
        %v274 = vadd.f32 %v259, %v272
        %v275 = vld [vmem:[%s1 + $0x5] sm:$0x1]
        %v276 = vlaneseq
        %v277 = vshrl.u32 %v276, 7
        %v278 = vsub.s32 0, %v277
        %v279 = vrot.slane %v275, %v278
        %281 = vrot.lane.b32.xlu0 %v279, 8
        %v282 = vpop.permute.xlu0 %281
        %v284 = vmul.f32 %v252, %v282
        %286 = vrot.lane.b32.xlu0 %v284, 120
        %v287 = vpop.permute.xlu0 %286
        %v289 = vadd.f32 %v274, %v287
        %s290 = sadd.s32 %s210, 2
        %s291 = scalar_lea.vmem %s209, %s290
        %v292 = vld [vmem:[%s291] sm:$0xff]
        %v293 = vld [vmem:[%s1 + $0x6] sm:$0x1]
        %v294 = vlaneseq
        %v295 = vshrl.u32 %v294, 7
        %v296 = vsub.s32 0, %v295
        %v297 = vrot.slane %v293, %v296
        %v298 = vmul.f32 %v292, %v297
        %v299 = vadd.f32 %v289, %v298
        %v300 = vld [vmem:[%s1 + $0x7] sm:$0x1]
        %v301 = vlaneseq
        %v302 = vshrl.u32 %v301, 7
        %v303 = vsub.s32 0, %v302
        %v304 = vrot.slane %v300, %v303
        %306 = vrot.lane.b32.xlu0 %v304, 4
        %v307 = vpop.permute.xlu0 %306
        %v309 = vmul.f32 %v292, %v307
        %311 = vrot.lane.b32.xlu0 %v309, 124
        %v312 = vpop.permute.xlu0 %311
        %v314 = vadd.f32 %v299, %v312
        %v315 = vld [vmem:[%s1 + $0x8] sm:$0x1]
        %v316 = vlaneseq
        %v317 = vshrl.u32 %v316, 7
        %v318 = vsub.s32 0, %v317
        %v319 = vrot.slane %v315, %v318
        %321 = vrot.lane.b32.xlu0 %v319, 8
        %v322 = vpop.permute.xlu0 %321
        %v324 = vmul.f32 %v292, %v322
        %326 = vrot.lane.b32.xlu0 %v324, 120
        %v327 = vpop.permute.xlu0 %326
        %v329 = vadd.f32 %v314, %v327
        %v330 = vld [vmem:[%s2] sm:$0xff]
        %v331 = vld [vmem:[%s2 + $0x8] sm:$0xff]
        %v332 = vld [vmem:[%s2 + $0x10] sm:$0xff]
        %v333 = vld [vmem:[%s2 + $0x18] sm:$0xff]
        %v334 = vld [vmem:[%s2 + $0x20] sm:$0xff]
        %v335 = vld [vmem:[%s2 + $0x28] sm:$0xff]
        %v336 = vld [vmem:[%s2 + $0x30] sm:$0xff]
        %v337 = vld [vmem:[%s2 + $0x38] sm:$0xff]
        %v338 = vld [vmem:[%s3] sm:$0x1]
        %v340 = vlaneseq
        %v341 = vshrl.u32 %v340, 7
        %v342 = vsub.s32 0, %v341
        %v343 = vrot.slane %v338, %v342
        %vm345 = vcmask 523264
        %v347 = vsel %vm345, %v329, 0
        %349 = vmatprep.subr.mxu0 0.0
        %350 = vmatpush1.msra.mxu0 0.0
        %351 = vmatprep.subr.mxu0 0.0
        %352 = vmatpush1.msra.mxu0 0.0
        %353 = vmatprep.subr.mxu0 0.0
        %354 = vmatpush1.msra.mxu0 0.0
        %355 = vmatprep.subr.mxu0 0.0
        %356 = vmatpush1.msra.mxu0 0.0
        %357 = vmatprep.subr.mxu0 0.0
        %358 = vmatpush1.msra.mxu0 0.0
        %359 = vmatprep.subr.mxu0 0.0
        %360 = vmatpush1.msra.mxu0 0.0
        %361 = vmatprep.subr.mxu0 0.0
        %362 = vmatpush1.msra.mxu0 0.0
        %363 = vmatprep.subr.mxu0 0.0
        %364 = vmatpush1.msra.mxu0 0.0
        %365 = vmatprep.subr.mxu0 0.0
        %366 = vmatpush1.msra.mxu0 %v337
        %367 = vmatprep.subr.mxu0 0.0
        %368 = vmatpush1.msra.mxu0 %v336
        %369 = vmatprep.subr.mxu0 0.0
        %370 = vmatpush1.msra.mxu0 %v335
        %371 = vmatprep.subr.mxu0 0.0
        %372 = vmatpush1.msra.mxu0 %v334
        %373 = vmatprep.subr.mxu0 0.0
        %374 = vmatpush1.msra.mxu0 %v333
        %375 = vmatprep.subr.mxu0 0.0
        %376 = vmatpush1.msra.mxu0 %v332
        %377 = vmatprep.subr.mxu0 0.0
        %378 = vmatpush1.msra.mxu0 %v331
        %379 = vmatprep.subr.mxu0 0.0
        %380 = vmatpush1.msra.mxu0 %v330
        %381 = vmatprep.subr.mxu0 0.0
        %382 = vmatpush2.msra.mxu0 0.0
        %383 = vmatprep.subr.mxu0 0.0
        %384 = vmatpush2.msra.mxu0 0.0
        %385 = vmatprep.subr.mxu0 0.0
        %386 = vmatpush2.msra.mxu0 0.0
        %387 = vmatprep.subr.mxu0 0.0
        %388 = vmatpush2.msra.mxu0 0.0
        %389 = vmatprep.subr.mxu0 0.0
        %390 = vmatpush2.msra.mxu0 0.0
        %391 = vmatprep.subr.mxu0 0.0
        %392 = vmatpush2.msra.mxu0 0.0
        %393 = vmatprep.subr.mxu0 0.0
        %394 = vmatpush2.msra.mxu0 0.0
        %395 = vmatprep.subr.mxu0 0.0
        %396 = vmatpush2.msra.mxu0 0.0
        %397 = vmatprep.subr.mxu0 0.0
        %398 = vmatpush2.msra.mxu0 0.0
        %399 = vmatprep.subr.mxu0 0.0
        %400 = vmatpush2.msra.mxu0 0.0
        %401 = vmatprep.subr.mxu0 0.0
        %402 = vmatpush2.msra.mxu0 0.0
        %403 = vmatprep.subr.mxu0 0.0
        %404 = vmatpush2.msra.mxu0 0.0
        %405 = vmatprep.subr.mxu0 0.0
        %406 = vmatpush2.msra.mxu0 0.0
        %407 = vmatprep.subr.mxu0 0.0
        %408 = vmatpush2.msra.mxu0 0.0
        %409 = vmatprep.subr.mxu0 0.0
        %410 = vmatpush2.msra.mxu0 0.0
        %411 = vmatprep.subr.mxu0 0.0
        %412 = vmatpush2.msra.mxu0 0.0
        %413 = vmatprep.mubr.f32.mxu0 0.0
        %414 = vmatmul.mubr.f32.gmra.mxu0 %v347
        %v415 = vpop.f32.mrf.mxu0
        %v416 = vadd.f32 %v343, %v415
        %v417 = vpop.f32.mrf.mxu0
        %418 = vdwg.mxu0
        %vm419 = vcmp.ge.f32.partialorder %v416, 0.0
        %v420 = vmul.f32 %v416, 0.01
        %v421 = vsel %vm419, %v416, %v420
        %422 = vst [vmem:[%s204] sm:$0xff] %v421
        %s423 = sand.u32 %s129, 1
        %s424 = scalar_lea.sflag [#allocation3], %s423
        %s425 = sand.u32 %s129, 1
        %s426 = smul.addr %s425, 8
        %s427 = scalar_lea.vmem [#allocation2], %s426
        // Predicated region
        $region37: #{tpu_custom_call.1} parent=35 // pred_check
          %p428 = pneg %p139
        $region38: #{tpu_custom_call.1} parent=35 // pred_check_branch
          %430 = sbr.rel (%p428) target = $region40
        $region39: #{tpu_custom_call.1} parent=35 // pred_region
          %s432 = ssub.s32 128, 128
          %433 = vsyncadd %s424, %s432
          %s434 = smul.addr %s22, 2
          %s435 = sadd.s32 %s23, %s434
          %s436 = smul.addr %s435, 128
          %s437 = scalar_lea.hbm %s4, %s436
          %s439 = sshll.u32 %s427, 4
          %s440 = int_to_ptr.vmem [resolvable:$true] %s439
          %442 = dma.vmem_to_hbm [thread:$0]  %s440, 128, %s437, %s424
        $region40: #{tpu_custom_call.1} parent=35 // pred_fallthru
          _
      $region36: #{tpu_custom_call.1} parent=5 // pred_fallthru
        _
      %p443 = scmp.le.s32.totalorder 2, %s13
      // Predicated region
      $region41: #{tpu_custom_call.1} parent=5 // pred_check
        %p444 = pneg %p443
      $region42: #{tpu_custom_call.1} parent=5 // pred_check_branch
        %446 = sbr.rel (%p444) target = $region44
      $region43: #{tpu_custom_call.1} parent=5 // pred_region
        %s447 = ssub.s32 %s13, 2
        // Predicated region
        $region45: #{tpu_custom_call.1} parent=43 // pred_check
          %p448 = pneg %p145
        $region46: #{tpu_custom_call.1} parent=43 // pred_check_branch
          %450 = sbr.rel (%p448) target = $region48
        $region47: #{tpu_custom_call.1} parent=43 // pred_region
          %s451 = sand.u32 %s130, 1
          %s452 = scalar_lea.sflag [#allocation3], %s451
          %s453 = sand.u32 %s130, 1
          %s454 = smul.addr %s453, 8
          %s455 = scalar_lea.vmem [#allocation2], %s454
          %456 = dma.done %s452, 128
        $region48: #{tpu_custom_call.1} parent=43 // pred_fallthru
          _
      $region44: #{tpu_custom_call.1} parent=5 // pred_fallthru
        _
    $region6: #{tpu_custom_call.1} parent=1 // loop_footer
      %s17 = sadd.s32 1, %s13
    $region7: #{tpu_custom_call.1} parent=1 // loop_footer_branch
      %12 = sbr.rel target = $region3
    $region8: #{tpu_custom_call.1} parent=1 // loop_exit
      _
    %457 = vsyncpa [#allocation3], 1
    %s458 = scalar_lea.sflag [#allocation3], 1
    %459 = vsyncpa %s458, 1

</llo_original>
